<compile_context>
chip_gen: v5e
topology: v5e:2x2
jax: 0.10.0
libtpu: 0.0.40
codegen_flags: <defaults>
</compile_context>

<pallas_src>
import functools
import numpy as np
import jax
import jax.numpy as jnp
from jax.experimental import pallas as pl
from jax.experimental.pallas import tpu as pltpu


def make_kernel(k):
    # Same as the PyTorch make_kernel (returns the 2-D normalized blur kernel).
    k = np.asarray(k, dtype=np.float32)
    if k.ndim == 1:
        k = k[None, :] * k[:, None]
    k = k / k.sum()
    return k


@functools.lru_cache(maxsize=None)
def _gather_mats_np(H, W, blur_kernel, factor, pad0, pad1):
    """Weight- and padding-folded gather matrices for upfirdn2d(up=1, down=factor).

    For each channel image x_g (H, W):
        (A @ x_g @ B)[y, x] == sum_{i,j} kflip[i]*kflip[j] * xpad[f*y+i, f*x+j]
    with xpad zero-padded by (pad0, pad1) per side, i.e. exactly
    upfirdn2d_native(x, k2d, up=1, down=factor, pad=(pad0, pad1)).
    Exact because the blur kernel is separable (outer product of a 1-D kernel).
    Returns numpy arrays (cached per shape); converted to device arrays per call.
    """
    k1 = np.asarray(blur_kernel, dtype=np.float64)
    assert k1.ndim == 1, "separable 1-D blur kernel expected (StyleGAN2 default)"
    k1n = k1 / k1.sum()            # 2-D blur = outer(k1n, k1n)
    kr = k1n[::-1]                 # F.conv2d(x, flip(k)) == correlate with flip(k)
    kt = kr.shape[0]

    def fold(n_in):
        n_conv = n_in + pad0 + pad1 - kt + 1          # VALID correlation length
        n_out = -(-n_conv // factor)                  # ceil-div: [::factor]
        o = np.arange(n_out)[:, None, None]           # output index
        t = np.arange(kt)[None, :, None]              # tap index
        s = np.arange(n_in)[None, None, :]            # source index (out-of-range
        m = (factor * o + t - pad0) == s              #  taps = padding -> no entry)
        return (m * kr[None, :, None]).sum(axis=1).astype(np.float32), n_out

    a_mat, Ho = fold(H)                                # (Ho, H)
    b_mat, Wo = fold(W)                                # (Wo, W) -> transpose below
    return a_mat, np.ascontiguousarray(b_mat.T), Ho, Wo


def _vmem_budget():
    """(per-step VMEM budget, vmem_limit_bytes) tuned per generation:
    128-MiB-VMEM parts (v5e/v6e) get a big budget; 64-MiB-per-TC v7x stays
    conservative so the tiling never thrashes/OOMs there."""
    cap = None
    try:
        cap = getattr(pltpu.get_tpu_info(), "vmem_capacity_bytes", None)
    except Exception:
        cap = None
    if cap is None:
        cap = 64 * 1024 * 1024                         # conservative default (v7x)
    if cap >= 100 * 1024 * 1024:                       # v5e / v6e: 128 MiB physical
        return 48 * 1024 * 1024, 96 * 1024 * 1024
    return 28 * 1024 * 1024, 48 * 1024 * 1024          # v7x: 64 MiB per TensorCore


def _pick_group(NC, H, W, Ho, Wo, itemsize, ab_bytes, budget_bytes, n_in_bufs=2):
    """Largest channels-per-step G that (a) divides NC, (b) keeps the (G*H, W)
    input block sublane-aligned, (c) fits the VMEM budget (buffered I/O,
    double-buffered A/B, in-kernel temporaries), and (d) keeps the grid length
    >= 4 so the "parallel" axis can feed multiple TensorCores."""
    sub = max(8, 32 // itemsize)          # sublane multiple: 8 f32 / 16 bf16
    hard_cap = 128                        # bounds the in-kernel repack unroll

    def fits(G):
        x_blk = n_in_bufs * G * H * W * itemsize
        o_blk = 2 * Ho * G * Wo * itemsize
        tmp = (2 * G * H * Wo + Ho * G * Wo) * 4       # t, scratch, out slab (~f32)
        return x_blk + o_blk + tmp + 2 * ab_bytes <= budget_bytes

    def aligned(G):
        return (G * H) % sub == 0 or G == NC           # block == full dim also OK

    divisors = [d for d in range(1, NC + 1) if NC % d == 0]
    min_steps = 4 if NC >= 8 else (2 if NC >= 2 else 1)
    for steps in (min_steps, 1):                       # prefer >= min_steps grid steps
        best = None
        for G in divisors:
            if G > hard_cap or NC // G < steps:
                continue
            if aligned(G) and fits(G):
                best = G
        if best is not None:
            return best
    for G in divisors:                                 # last resort: smallest aligned
        if aligned(G):
            return G
    return NC


def _make_pallas_kernel(G, H, Wo):
    def kernel(x_ref, a_ref, b_ref, o_ref, tw_ref):
        # Pass 1 (horizontal blur+downsample): ONE wide-M MXU matmul,
        #   (G*H, W) @ (W, Wo) -> (G*H, Wo); taps and padding are folded into B.
        t = jnp.dot(x_ref[...], b_ref[...],
                    preferred_element_type=jnp.float32).astype(tw_ref.dtype)
        if G > 1:
            # Column-block the per-channel results (channels along the lane axis)
            # into the (H, G*Wo) VMEM scratch so the vertical pass is ONE matmul.
            for g in range(G):
                tw_ref[:, g * Wo:(g + 1) * Wo] = t[g * H:(g + 1) * H, :]
            tw = tw_ref[...]
        else:
            tw = t
        # Pass 2 (vertical): ONE wide-N MXU matmul -> lane-dense (Ho, G*Wo) slab.
        slab = jnp.dot(a_ref[...], tw, preferred_element_type=jnp.float32)
        o_ref[0] = slab.astype(o_ref.dtype)
    return kernel


def build_downsample(blur_kernel=(1, 3, 3, 1), factor=2, pad=None,
                     extra_input_buffering=False):
    """forward(x) == upfirdn2d(x, make_kernel(blur_kernel), up=1, down=factor, pad).
    factor=2 with the default pad is the blur+downsample building block; factor=1
    with ModulatedConv2d's pad gives its pre-conv Blur."""
    k2d = make_kernel(blur_kernel)                     # registered-buffer equivalent
    k1d = tuple(float(v) for v in np.asarray(blur_kernel, dtype=np.float64).ravel())
    kt = len(k1d)
    if pad is None:
        p = kt - factor
        pad = ((p + 1) // 2, p // 2)
    pad0, pad1 = int(pad[0]), int(pad[1])
    budget_bytes, vmem_limit = _vmem_budget()

    @jax.jit
    def forward(x):
        N, C, H, W = x.shape
        NC = N * C
        a_np, b_np, Ho, Wo = _gather_mats_np(H, W, k1d, factor, pad0, pad1)

        # Match MXU operand dtypes (exact for the small dyadic (1,3,3,1) taps).
        ab_dtype = jnp.bfloat16 if x.dtype == jnp.bfloat16 else jnp.float32
        A = jnp.asarray(a_np, dtype=ab_dtype)          # (Ho, H)
        B = jnp.asarray(b_np, dtype=ab_dtype)          # (W,  Wo)

        itemsize = x.dtype.itemsize
        ab_bytes = (Ho * H + W * Wo) * np.dtype(ab_dtype).itemsize
        n_in_bufs = 3 if extra_input_buffering else 2
        G = _pick_group(NC, H, W, Ho, Wo, itemsize, ab_bytes, budget_bytes, n_in_bufs)
        NCg = NC // G

        x2 = x.reshape(NC * H, W)                      # free reshape: no pad, no cast

        x_spec = pl.BlockSpec((G * H, W), lambda n: (n, 0))
        if extra_input_buffering and hasattr(pl, "Buffered"):
            try:   # deeper input pipelining for tiny blocks (optional sweep knob)
                x_spec = pl.BlockSpec((G * H, W), lambda n: (n, 0),
                                      pipeline_mode=pl.Buffered(3))
            except TypeError:
                pass

        cost = pl.CostEstimate(
            flops=2 * NC * Wo * H * (W + Ho),
            transcendentals=0,
            bytes_accessed=NC * (H * W + Ho * Wo) * itemsize + ab_bytes)

        out = pl.pallas_call(
            _make_pallas_kernel(G, H, Wo),
            out_shape=jax.ShapeDtypeStruct((NCg, Ho, G * Wo), x.dtype),
            grid_spec=pltpu.PrefetchScalarGridSpec(
                num_scalar_prefetch=0,
                grid=(NCg,),
                in_specs=[
                    x_spec,                                      # G channels / step
                    pl.BlockSpec((Ho, H), lambda n: (0, 0)),     # A, resident
                    pl.BlockSpec((W, Wo), lambda n: (0, 0)),     # B, resident
                ],
                out_specs=pl.BlockSpec((1, Ho, G * Wo), lambda n: (n, 0, 0)),
                scratch_shapes=[pltpu.VMEM((H, G * Wo), ab_dtype)],
            ),
            compiler_params=pltpu.CompilerParams(
                dimension_semantics=("parallel",),   # megacore / v7x dual-TC sharding
                vmem_limit_bytes=vmem_limit),
            cost_estimate=cost,
        )(x2, A, B)

        # Un-pack the lane-dense (Ho, G*Wo) slabs on the (4x smaller) output only.
        out = out.reshape(NCg, Ho, G, Wo).transpose(0, 2, 1, 3)
        return out.reshape(N, C, Ho, Wo)

    return forward, k2d, (pad0, pad1)


def reference(x, k2d, factor, pad):
    # Pure-JAX reference: strided VALID correlation with the flipped blur kernel
    # (== upfirdn2d(x, k2d, up=1, down=factor, pad=pad)).
    pad0, pad1 = pad
    N, C, H, W = x.shape
    kf = jnp.flip(jnp.asarray(k2d, dtype=jnp.float32), (0, 1))
    xpad = jnp.pad(x, ((0, 0), (0, 0), (pad0, pad1), (pad0, pad1)))
    xr = xpad.reshape(N * C, 1, xpad.shape[2], xpad.shape[3])
    out = jax.lax.conv_general_dilated(xr, kf[None, None],
                                       window_strides=(factor, factor),
                                       padding="VALID")
    return out.reshape(N, C, out.shape[2], out.shape[3])


if __name__ == "__main__":
    forward, k2d, pad = build_downsample(blur_kernel=(1, 3, 3, 1), factor=2)

    # Small shape consistent with the module (batch=2, channels=4, spatial=16).
    x = jax.random.normal(jax.random.PRNGKey(0), (2, 4, 16, 16), dtype=jnp.float32)
    out = jax.block_until_ready(forward(x))
    ref = reference(x, k2d, 2, pad)
    assert out.shape == (2, 4, 8, 8), out.shape
    np.testing.assert_allclose(np.asarray(out), np.asarray(ref), rtol=1e-5, atol=1e-5)

    # Second shape: exercises a multi-step grid, G > 1 lane-packing, larger blocks.
    x2 = jax.random.normal(jax.random.PRNGKey(1), (2, 64, 32, 32), dtype=jnp.float32)
    out2 = jax.block_until_ready(forward(x2))
    ref2 = reference(x2, k2d, 2, pad)
    assert out2.shape == (2, 64, 16, 16), out2.shape
    np.testing.assert_allclose(np.asarray(out2), np.asarray(ref2), rtol=1e-5, atol=1e-5)

    print("KERNEL_OK")
</pallas_src>

<mosaic_0001>
module attributes {stable_mosaic.version = 11 : i64} {
  func.func @kernel(%arg0: i32, %arg1: memref<32x16xf32, #tpu.memory_space<vmem>>, %arg2: memref<8x16xf32, #tpu.memory_space<vmem>>, %arg3: memref<16x8xf32, #tpu.memory_space<vmem>>, %arg4: memref<1x8x16xf32, #tpu.memory_space<vmem>>, %arg5: memref<16x16xf32, #tpu.memory_space<vmem>>) attributes {dimension_semantics = [#tpu.dimension_semantics<parallel>], iteration_bounds = array<i64: 4>, scalar_prefetch = 0 : i64, scratch_operands = 1 : i64, tpu.core_type = #tpu.core_type<tc>, window_params = [{transform_indices = @transform_0, window_bounds = array<i64: 32, 16>}, {pipeline_mode = #tpu.pipeline_mode<synchronous>, transform_indices = @transform_1, window_bounds = array<i64: 8, 16>}, {pipeline_mode = #tpu.pipeline_mode<synchronous>, transform_indices = @transform_2, window_bounds = array<i64: 16, 8>}, {transform_indices = @transform_3, window_bounds = array<i64: 1, 8, 16>}]} {
    %c0 = arith.constant 0 : index
    %c0_0 = arith.constant 0 : index
    %0 = vector.load %arg1[%c0, %c0_0] : memref<32x16xf32, #tpu.memory_space<vmem>>, vector<32x16xf32>
    %c0_1 = arith.constant 0 : index
    %c0_2 = arith.constant 0 : index
    %1 = vector.load %arg3[%c0_1, %c0_2] : memref<16x8xf32, #tpu.memory_space<vmem>>, vector<16x8xf32>
    %cst = arith.constant dense<0.000000e+00> : vector<32x8xf32>
    %2 = tpu.matmul %0, %1, %cst {dimension_numbers = #tpu.dot_dimension_numbers<[1], [0], [0], [1], [0, 0, 1, 1], [], []>} : vector<32x16xf32>, vector<16x8xf32>, vector<32x8xf32> -> vector<32x8xf32>
    %3 = vector.extract_strided_slice %2 {offsets = [0, 0], sizes = [16, 8], strides = [1, 1]} : vector<32x8xf32> to vector<16x8xf32>
    %c0_3 = arith.constant 0 : index
    %c0_4 = arith.constant 0 : index
    %4 = vector.load %arg5[%c0_3, %c0_4] : memref<16x16xf32, #tpu.memory_space<vmem>>, vector<16x8xf32>
    tpu.vector_store %arg5[%c0_3, %c0_4], %3 {strides = array<i32>} : memref<16x16xf32, #tpu.memory_space<vmem>>, vector<16x8xf32>,
    %5 = vector.extract_strided_slice %2 {offsets = [16, 0], sizes = [16, 8], strides = [1, 1]} : vector<32x8xf32> to vector<16x8xf32>
    %c0_5 = arith.constant 0 : index
    %c8 = arith.constant 8 : index
    %6 = vector.load %arg5[%c0_5, %c8] : memref<16x16xf32, #tpu.memory_space<vmem>>, vector<16x8xf32>
    tpu.vector_store %arg5[%c0_5, %c8], %5 {strides = array<i32>} : memref<16x16xf32, #tpu.memory_space<vmem>>, vector<16x8xf32>,
    %c0_6 = arith.constant 0 : index
    %c0_7 = arith.constant 0 : index
    %7 = vector.load %arg5[%c0_6, %c0_7] : memref<16x16xf32, #tpu.memory_space<vmem>>, vector<16x16xf32>
    %c0_8 = arith.constant 0 : index
    %c0_9 = arith.constant 0 : index
    %8 = vector.load %arg2[%c0_8, %c0_9] : memref<8x16xf32, #tpu.memory_space<vmem>>, vector<8x16xf32>
    %cst_10 = arith.constant dense<0.000000e+00> : vector<8x16xf32>
    %9 = tpu.matmul %8, %7, %cst_10 {dimension_numbers = #tpu.dot_dimension_numbers<[1], [0], [0], [1], [0, 0, 1, 1], [], []>} : vector<8x16xf32>, vector<16x16xf32>, vector<8x16xf32> -> vector<8x16xf32>
    %c0_11 = arith.constant 0 : index
    %c0_12 = arith.constant 0 : index
    %c0_13 = arith.constant 0 : index
    %10 = vector.load %arg4[%c0_11, %c0_12, %c0_13] : memref<1x8x16xf32, #tpu.memory_space<vmem>>, vector<1x8x16xf32>
    %11 = vector.shape_cast %10 : vector<1x8x16xf32> to vector<8x16xf32>
    %12 = vector.shape_cast %9 : vector<8x16xf32> to vector<1x8x16xf32>
    tpu.vector_store %arg4[%c0_11, %c0_12, %c0_13], %12 {strides = array<i32>} : memref<1x8x16xf32, #tpu.memory_space<vmem>>, vector<1x8x16xf32>,
    return
  }
  func.func @transform_0(%arg0: i32) -> (i32, i32) {
    %c0_i32 = arith.constant 0 : i32
    %c0_i32_0 = arith.constant 0 : i32
    return %arg0, %c0_i32 : i32, i32
  }
  func.func @transform_1(%arg0: i32) -> (i32, i32) {
    %c0_i32 = arith.constant 0 : i32
    %c0_i32_0 = arith.constant 0 : i32
    %c0_i32_1 = arith.constant 0 : i32
    return %c0_i32, %c0_i32_0 : i32, i32
  }
  func.func @transform_2(%arg0: i32) -> (i32, i32) {
    %c0_i32 = arith.constant 0 : i32
    %c0_i32_0 = arith.constant 0 : i32
    %c0_i32_1 = arith.constant 0 : i32
    return %c0_i32, %c0_i32_0 : i32, i32
  }
  func.func @transform_3(%arg0: i32) -> (i32, i32, i32) {
    %c0_i32 = arith.constant 0 : i32
    %c0_i32_0 = arith.constant 0 : i32
    %c0_i32_1 = arith.constant 0 : i32
    return %arg0, %c0_i32, %c0_i32_0 : i32, i32, i32
  }
}

</mosaic_0001>

<llo_original>
// kernel: forward.1
$region0: #{forward.1}
  #allocation0 [shape = 'u32[]', space=smem, size = 0x4, offset = 0x4, fixed_abs, tag = 'smem constant byte address 0x4 - core index']
  #allocation1 [shape = 'u32[72,128]{1,0:T(1,128)}', space=vmem, size = 0x9000, scoped, tag = 'internal scratch']
  #allocation2 [shape = 'f32[16,16]{1,0:T(8,128)}', space=vmem, size = 0x2000, scoped, tag = 'scratch operand']
  %s0 = inlined_call_operand.hbm [shape: f32[128,16], index: 0, kind: input, shape index: {}]
  %s1 = inlined_call_operand.hbm [shape: f32[8,16], index: 1, kind: input, shape index: {}]
  %s2 = inlined_call_operand.hbm [shape: f32[16,8], index: 2, kind: input, shape index: {}]
  %s3 = inlined_call_operand.vmem [shape: f32[4,8,16], index: 3, kind: output, shape index: {}]
  %s4 = sld [smem:[#allocation0]]
  $region57: #{forward.1} parent=0
    _
  %s6 = ssub.s32 1, %s4
  %s7 = scalar_select 0, %s6, %s4
  $region1: #{forward.1} parent=0
    #allocation3 [shape = 'u8[32768]{0}', space=vmem, size = 0x8000, scoped, tag = 'input window, operand 0']
    #allocation4 [shape = 's32[2]{0}', space=sflag, size = 0x8, scoped, tag = 'scoped memory for forward.1']
    #allocation5 [shape = 'u8[4096]{0}', space=vmem, size = 0x1000, scoped, tag = 'input window, operand 1, single buffered']
    #allocation6 [shape = 's32[1]{0}', space=sflag, size = 0x4, scoped, tag = 'scoped memory for forward.1']
    #allocation7 [shape = 'u8[8192]{0}', space=vmem, size = 0x2000, scoped, tag = 'input window, operand 2, single buffered']
    %8 = vsyncpa [#allocation4], 0
    %s9 = scalar_lea.sflag [#allocation4], 1
    %10 = vsyncpa %s9, 0
    %11 = vsyncpa [#allocation6], 0
    loop: start=0, step=1, limit=6
    $region2: #{forward.1} parent=1 // loop_pre_header
      _
    $region3: #{forward.1} parent=1 // loop_header
      %s13 = sphi 0, %s17
      %p14 = scmp.ge.s32.totalorder %s13, 6
      %s23 = sphi 0, %s25
      %s26 = sphi 0, %s23
      %s27 = sphi 0, %s26
      %s43 = sphi 0, %s27
      %s47 = sphi 0, %s47
      %s49 = sphi 0, %s47
      %s50 = sphi 0, %s49
      %s64 = sphi 0, %s50
      %s68 = sphi 0, %s68
      %s70 = sphi 0, %s68
      %s71 = sphi 0, %s70
      %s85 = sphi 0, %s71
      %s91 = sphi 0, %s93
      %s94 = sphi 0, %s91
      %s95 = sphi 0, %s94
      %s111 = sphi 0, %s95
    $region4: #{forward.1} parent=1 // loop_header_branch
      %16 = sbr.rel (%p14) target = $region8
    $region5: #{forward.1} parent=1 // loop_body
      %s18 = ssub.s32 %s13, 1
      %s19 = ssub.s32 %s13, 2
      %s20 = sadd.s32 %s13, 1
      %s21 = ssub.s32 %s13, %s20
      %p22 = scmp.eq.s32.totalorder %s21, 0
      %s24 = sadd.s32 %s23, 1
      %s25 = scalar_select %p22, %s23, %s24
      %p28 = pneg %p22
      %p29 = scmp.eq.s32.totalorder %s13, 3
      %p30 = por %p28, %p29
      %p31 = scmp.ne.s32.totalorder %s23, %s26
      %p32 = scmp.eq.s32.totalorder %s13, 0
      %p33 = por %p31, %p32
      %p34 = scmp.ne.s32.totalorder %s23, %s26
      %p35 = scmp.eq.s32.totalorder %s18, 3
      %p36 = por %p34, %p35
      %p37 = scmp.ne.s32.totalorder %s26, %s27
      %p38 = scmp.eq.s32.totalorder %s18, 0
      %p39 = por %p37, %p38
      %p40 = scmp.ne.s32.totalorder %s26, %s27
      %p41 = scmp.eq.s32.totalorder %s19, 3
      %p42 = por %p40, %p41
      %p44 = scmp.ne.s32.totalorder %s27, %s43
      %p45 = scmp.eq.s32.totalorder %s19, 0
      %p46 = por %p44, %p45
      %s48 = sadd.s32 %s47, 1
      %p51 = scmp.eq.s32.totalorder %s13, 3
      %p52 = scmp.ne.s32.totalorder %s47, %s49
      %p53 = scmp.eq.s32.totalorder %s13, 0
      %p54 = por %p52, %p53
      %p55 = scmp.ne.s32.totalorder %s47, %s49
      %p56 = scmp.eq.s32.totalorder %s18, 3
      %p57 = por %p55, %p56
      %p58 = scmp.ne.s32.totalorder %s49, %s50
      %p59 = scmp.eq.s32.totalorder %s18, 0
      %p60 = por %p58, %p59
      %p61 = scmp.ne.s32.totalorder %s49, %s50
      %p62 = scmp.eq.s32.totalorder %s19, 3
      %p63 = por %p61, %p62
      %p65 = scmp.ne.s32.totalorder %s50, %s64
      %p66 = scmp.eq.s32.totalorder %s19, 0
      %p67 = por %p65, %p66
      %s69 = sadd.s32 %s68, 1
      %p72 = scmp.eq.s32.totalorder %s13, 3
      %p73 = scmp.ne.s32.totalorder %s68, %s70
      %p74 = scmp.eq.s32.totalorder %s13, 0
      %p75 = por %p73, %p74
      %p76 = scmp.ne.s32.totalorder %s68, %s70
      %p77 = scmp.eq.s32.totalorder %s18, 3
      %p78 = por %p76, %p77
      %p79 = scmp.ne.s32.totalorder %s70, %s71
      %p80 = scmp.eq.s32.totalorder %s18, 0
      %p81 = por %p79, %p80
      %p82 = scmp.ne.s32.totalorder %s70, %s71
      %p83 = scmp.eq.s32.totalorder %s19, 3
      %p84 = por %p82, %p83
      %p86 = scmp.ne.s32.totalorder %s71, %s85
      %p87 = scmp.eq.s32.totalorder %s19, 0
      %p88 = por %p86, %p87
      %s89 = ssub.s32 %s13, %s20
      %p90 = scmp.eq.s32.totalorder %s89, 0
      %s92 = sadd.s32 %s91, 1
      %s93 = scalar_select %p90, %s91, %s92
      %p96 = pneg %p90
      %p97 = scmp.eq.s32.totalorder %s13, 3
      %p98 = por %p96, %p97
      %p99 = scmp.ne.s32.totalorder %s91, %s94
      %p100 = scmp.eq.s32.totalorder %s13, 0
      %p101 = por %p99, %p100
      %p102 = scmp.ne.s32.totalorder %s91, %s94
      %p103 = scmp.eq.s32.totalorder %s18, 3
      %p104 = por %p102, %p103
      %p105 = scmp.ne.s32.totalorder %s94, %s95
      %p106 = scmp.eq.s32.totalorder %s18, 0
      %p107 = por %p105, %p106
      %p108 = scmp.ne.s32.totalorder %s94, %s95
      %p109 = scmp.eq.s32.totalorder %s19, 3
      %p110 = por %p108, %p109
      %p112 = scmp.ne.s32.totalorder %s95, %s111
      %p113 = scmp.eq.s32.totalorder %s19, 0
      %p114 = por %p112, %p113
      %p115 = scmp.le.s32.totalorder 1, %s13
      %p116 = scmp.lt.s32.totalorder %s13, 5
      %p117 = pnand %p115, %p116
      %p118 = pneg %p117
      // Predicated region
      $region9: #{forward.1} parent=5 // pred_check
        _
      $region10: #{forward.1} parent=5 // pred_check_branch
        %120 = sbr.rel (%p117) target = $region12
      $region11: #{forward.1} parent=5 // pred_region
        %s121 = ssub.s32 %s13, 1
        // Predicated region
        $region13: #{forward.1} parent=11 // pred_check
          %p122 = pneg %p60
        $region14: #{forward.1} parent=11 // pred_check_branch
          %124 = sbr.rel (%p122) target = $region16
        $region15: #{forward.1} parent=11 // pred_region
          %126 = vsyncadd [#allocation6], 0
          %s128 = sshll.u32 %s1, 4
          %s129 = int_to_ptr.hbm [resolvable:$true] %s128
          %s130 = sshll.u32 [#allocation5], 4
          %s131 = int_to_ptr.vmem [resolvable:$true] %s130
          %133 = dma.hbm_to_vmem [thread:$0]  %s129, 128, %s131, [#allocation6]
        $region16: #{forward.1} parent=11 // pred_fallthru
          _
        // Predicated region
        $region17: #{forward.1} parent=11 // pred_check
          %p134 = pneg %p81
        $region18: #{forward.1} parent=11 // pred_check_branch
          %136 = sbr.rel (%p134) target = $region20
        $region19: #{forward.1} parent=11 // pred_region
          %138 = vsyncadd [#allocation6], 0
          %s139 = sshll.u32 %s2, 4
          %s140 = int_to_ptr.hbm [resolvable:$true] %s139
          %s141 = sshll.u32 [#allocation7], 4
          %s142 = int_to_ptr.vmem [resolvable:$true] %s141
          %147 = dma.hbm_to_vmem [thread:$0]  %s140, 256, %s142, [#allocation6], 128, 128, 8
        $region20: #{forward.1} parent=11 // pred_fallthru
          _
      $region12: #{forward.1} parent=5 // pred_fallthru
        _
      %p148 = scmp.lt.s32.totalorder %s13, 4
      // Predicated region
      $region21: #{forward.1} parent=5 // pred_check
        %p149 = pneg %p148
      $region22: #{forward.1} parent=5 // pred_check_branch
        %151 = sbr.rel (%p149) target = $region24
      $region23: #{forward.1} parent=5 // pred_region
        // Predicated region
        $region25: #{forward.1} parent=23 // pred_check
          %p152 = pneg %p33
        $region26: #{forward.1} parent=23 // pred_check_branch
          %154 = sbr.rel (%p152) target = $region28
        $region27: #{forward.1} parent=23 // pred_region
          %s155 = sand.u32 %s23, 1
          %s156 = scalar_lea.sflag [#allocation4], %s155
          %s157 = sand.u32 %s23, 1
          %s158 = smul.addr %s157, 32
          %s159 = scalar_lea.vmem [#allocation3], %s158
          %s160 = smul.u32 4, %s13
          %162 = vsyncadd %s156, 0
          %s163 = smul.addr %s160, 8
          %s164 = scalar_lea.hbm %s0, %s163
          %s165 = sshll.u32 %s164, 4
          %s166 = int_to_ptr.hbm [resolvable:$true] %s165
          %s167 = sshll.u32 %s159, 4
          %s168 = int_to_ptr.vmem [resolvable:$true] %s167
          %173 = dma.hbm_to_vmem [thread:$0]  %s166, 512, %s168, %s156, 128, 128, 8
        $region28: #{forward.1} parent=23 // pred_fallthru
          _
      $region24: #{forward.1} parent=5 // pred_fallthru
        _
      %p174 = scmp.le.s32.totalorder 1, %s13
      %p175 = scmp.lt.s32.totalorder %s13, 5
      %p176 = pnand %p174, %p175
      %p177 = pneg %p176
      // Predicated region
      $region29: #{forward.1} parent=5 // pred_check
        _
      $region30: #{forward.1} parent=5 // pred_check_branch
        %179 = sbr.rel (%p176) target = $region32
      $region31: #{forward.1} parent=5 // pred_region
        %s180 = ssub.s32 %s13, 1
        %s181 = sand.u32 %s26, 1
        %s182 = scalar_lea.sflag [#allocation4], %s181
        %s183 = sand.u32 %s26, 1
        %s184 = smul.addr %s183, 32
        %s185 = scalar_lea.vmem [#allocation3], %s184
        // Predicated region
        $region33: #{forward.1} parent=31 // pred_check
          %p186 = pneg %p39
        $region34: #{forward.1} parent=31 // pred_check_branch
          %188 = sbr.rel (%p186) target = $region36
        $region35: #{forward.1} parent=31 // pred_region
          %190 = dma.done %s182, 512
        $region36: #{forward.1} parent=31 // pred_fallthru
          _
        // Predicated region
        $region37: #{forward.1} parent=31 // pred_check
          %p191 = pneg %p60
        $region38: #{forward.1} parent=31 // pred_check_branch
          %193 = sbr.rel (%p191) target = $region40
        $region39: #{forward.1} parent=31 // pred_region
          %195 = dma.done [#allocation6], 128
        $region40: #{forward.1} parent=31 // pred_fallthru
          _
        // Predicated region
        $region41: #{forward.1} parent=31 // pred_check
          %p196 = pneg %p81
        $region42: #{forward.1} parent=31 // pred_check_branch
          %198 = sbr.rel (%p196) target = $region44
        $region43: #{forward.1} parent=31 // pred_region
          %200 = dma.done [#allocation6], 256
        $region44: #{forward.1} parent=31 // pred_fallthru
          _
        %s201 = sand.u32 %s26, 1
        %s202 = scalar_lea.sflag [#allocation4], %s201
        %s203 = sand.u32 %s26, 1
        %s204 = smul.addr %s203, 32
        %s205 = scalar_lea.vmem [#allocation3], %s204
        %p206 = pneg %p39
        %p207 = pneg %p36
        %p208 = pneg %p60
        %p209 = pneg %p57
        %p210 = pneg %p81
        %p211 = pneg %p78
        %p212 = pneg %p107
        %p213 = pneg %p104
        %p214 = scmp.lt.s32.totalorder %s18, 3
        %s215 = scalar_select %p214, %s18, 3
        %s216 = smul.addr %s215, 8
        %s217 = scalar_lea.vmem %s3, %s216
        %s218 = smul.u32 4, %s18
        %p219 = scmp.lt.s32.totalorder %s18, 3
        %s220 = scalar_select %p219, %s18, 3
        %s221 = smul.addr %s220, 8
        %s222 = scalar_lea.vmem %s3, %s221
        %v223 = vld [vmem:[%s185] sm:$0xff]
        %v224 = vld [vmem:[%s185 + $0x8] sm:$0xff]
        %v225 = vld [vmem:[%s185 + $0x10] sm:$0xff]
        %v226 = vld [vmem:[%s185 + $0x18] sm:$0xff]
        %v227 = vld [vmem:[#allocation7] sm:$0xff]
        %v228 = vld [vmem:[#allocation7 + $0x8] sm:$0xff]
        %vm229 = vcmask 130048
        %v231 = vsel %vm229, %v223, 0
        %v234 = vsel %vm229, %v224, 0
        %v237 = vsel %vm229, %v225, 0
        %v240 = vsel %vm229, %v226, 0
        %242 = vmatpush.msra.mxu0 0.0
        %243 = vmatpush.msra.mxu0 0.0
        %244 = vmatpush.msra.mxu0 0.0
        %245 = vmatpush.msra.mxu0 0.0
        %246 = vmatpush.msra.mxu0 0.0
        %247 = vmatpush.msra.mxu0 0.0
        %248 = vmatpush.msra.mxu0 0.0
        %249 = vmatpush.msra.mxu0 0.0
        %250 = vmatpush.msra.mxu0 0.0
        %251 = vmatpush.msra.mxu0 0.0
        %252 = vmatpush.msra.mxu0 0.0
        %253 = vmatpush.msra.mxu0 0.0
        %254 = vmatpush.msra.mxu0 0.0
        %255 = vmatpush.msra.mxu0 0.0
        %256 = vmatpush.msra.mxu0 %v228
        %257 = vmatpush.msra.mxu0 %v227
        %258 = vmatmul.f32.gmra.mxu0 %v231
        %v259 = vpop.f32.mrf.mxu0
        %v260 = vadd.f32 0.0, %v259
        %261 = vmatmul.f32.gmra.mxu0 %v234
        %v262 = vpop.f32.mrf.mxu0
        %v263 = vadd.f32 0.0, %v262
        %264 = vmatmul.f32.gmra.mxu0 %v237
        %v265 = vpop.f32.mrf.mxu0
        %v266 = vadd.f32 0.0, %v265
        %267 = vmatmul.f32.gmra.mxu0 %v240
        %v268 = vpop.f32.mrf.mxu0
        %v269 = vadd.f32 0.0, %v268
        %270 = vdwg.mxu0
        %vm271 = vcmask 64512
        %272 = vst.msk [vmem:[#allocation2] sm:$0xff] %vm271, %v260
        %273 = vst.msk [vmem:[#allocation2 + $0x8] sm:$0xff] %vm271, %v263
        %276 = vrot.lane.b32.xlu0 %v266, 8
        %v277 = vpop.permute.xlu0 %276
        %278 = vrot.lane.b32.xlu0 %v269, 8
        %v279 = vpop.permute.xlu0 %278
        %vm282 = vcmask 130112
        %283 = vst.msk [vmem:[#allocation2] sm:$0xff] %vm282, %v277
        %284 = vst.msk [vmem:[#allocation2 + $0x8] sm:$0xff] %vm282, %v279
        %v285 = vld [vmem:[#allocation2] sm:$0xff]
        %v286 = vld [vmem:[#allocation2 + $0x8] sm:$0xff]
        %v287 = vld [vmem:[#allocation5] sm:$0xff]
        %v289 = vsel %vm229, %v287, 0
        %291 = vmatpush.msra.mxu0 0.0
        %292 = vmatpush.msra.mxu0 0.0
        %293 = vmatpush.msra.mxu0 0.0
        %294 = vmatpush.msra.mxu0 0.0
        %295 = vmatpush.msra.mxu0 0.0
        %296 = vmatpush.msra.mxu0 0.0
        %297 = vmatpush.msra.mxu0 0.0
        %298 = vmatpush.msra.mxu0 0.0
        %299 = vmatpush.msra.mxu0 0.0
        %300 = vmatpush.msra.mxu0 0.0
        %301 = vmatpush.msra.mxu0 0.0
        %302 = vmatpush.msra.mxu0 0.0
        %303 = vmatpush.msra.mxu0 0.0
        %304 = vmatpush.msra.mxu0 0.0
        %305 = vmatpush.msra.mxu0 %v286
        %306 = vmatpush.msra.mxu0 %v285
        %307 = vmatmul.f32.gmra.mxu0 %v289
        %v308 = vpop.f32.mrf.mxu0
        %v309 = vadd.f32 0.0, %v308
        %310 = vdwg.mxu0
        %311 = vst.msk [vmem:[%s222] sm:$0xff] %vm229, %v309
        %p312 = scmp.lt.s32.totalorder %s18, 3
        %s313 = scalar_select %p312, %s18, 3
        %s314 = smul.addr %s313, 8
        %s315 = scalar_lea.vmem %s3, %s314
        // Predicated region
        $region45: #{forward.1} parent=31 // pred_check
          %p316 = pneg %p104
        $region46: #{forward.1} parent=31 // pred_check_branch
          %318 = sbr.rel (%p316) target = $region48
        $region47: #{forward.1} parent=31 // pred_region
          _
        $region48: #{forward.1} parent=31 // pred_fallthru
          _
      $region32: #{forward.1} parent=5 // pred_fallthru
        _
      %p319 = scmp.le.s32.totalorder 2, %s13
      // Predicated region
      $region49: #{forward.1} parent=5 // pred_check
        %p320 = pneg %p319
      $region50: #{forward.1} parent=5 // pred_check_branch
        %322 = sbr.rel (%p320) target = $region52
      $region51: #{forward.1} parent=5 // pred_region
        %s323 = ssub.s32 %s13, 2
        // Predicated region
        $region53: #{forward.1} parent=51 // pred_check
          %p324 = pneg %p110
        $region54: #{forward.1} parent=51 // pred_check_branch
          %326 = sbr.rel (%p324) target = $region56
        $region55: #{forward.1} parent=51 // pred_region
          %p327 = scmp.lt.s32.totalorder %s19, 3
          %s328 = scalar_select %p327, %s19, 3
          %s329 = smul.addr %s328, 8
          %s330 = scalar_lea.vmem %s3, %s329
        $region56: #{forward.1} parent=51 // pred_fallthru
          _
      $region52: #{forward.1} parent=5 // pred_fallthru
        _
    $region6: #{forward.1} parent=1 // loop_footer
      %s17 = sadd.s32 1, %s13
    $region7: #{forward.1} parent=1 // loop_footer_branch
      %12 = sbr.rel target = $region3
    $region8: #{forward.1} parent=1 // loop_exit
      _
    %331 = vsyncpa [#allocation4], 1
    %s332 = scalar_lea.sflag [#allocation4], 1
    %333 = vsyncpa %s332, 1
    %334 = vsyncpa [#allocation6], 1

</llo_original>
